<compile_context>
chip_gen: v7x
topology: tpu7x:2x2x1
jax: 0.10.0
libtpu: 0.0.40
codegen_flags: <defaults>
</compile_context>

<pallas_src>
import jax
import jax.numpy as jnp
from jax.experimental import pallas as pl
from jax.experimental.pallas import tpu as pltpu


def mlp_kernel(xt_ref, w1t_ref, b1_ref, w2t_ref, b2_ref, ot_ref):
    # xt: (24, TILE_B)  w1t: (15, 24)  b1: (15, 1)  w2t: (6, 15)  b2: (6, 1)
    h = jnp.dot(w1t_ref[...], xt_ref[...], preferred_element_type=jnp.float32)
    h = jnp.maximum(h + b1_ref[...], 0.0)
    h = h.astype(w2t_ref.dtype)  # no-op in f32; keeps MXU in bf16 if enabled
    y = jnp.dot(w2t_ref[...], h, preferred_element_type=jnp.float32)
    ot_ref[...] = (y + b2_ref[...]).astype(ot_ref.dtype)


def _round_up(n, m):
    return ((n + m - 1) // m) * m


def mlp_forward(x, w1, b1, w2, b2, *, tile_b=1024, use_bf16=False):
    """y = relu(x @ w1 + b1) @ w2 + b2.

    x: (B, 24) f32; w1: (24, 15); b1: (15,); w2: (15, 6); b2: (6,).
    Returns (B, 6) float32.
    """
    B, in_dim = x.shape
    hid_dim = w1.shape[1]
    out_dim = w2.shape[1]

    # Lane tile for the batch axis: multiple of 128, large enough to amortize
    # per-grid-step overhead, never larger than the padded batch.  At f32 a
    # (24, 1024) tile is <100 KiB per buffer, comfortably inside v7x's 64 MiB
    # VMEM (32 MiB scoped default) with double buffering.
    tile_b = max(128, min(tile_b, _round_up(B, 128)))
    b_pad = _round_up(B, tile_b)

    cdt = jnp.bfloat16 if use_bf16 else jnp.float32

    # One-off layout plumbing in the wrapper: feature-major, batch on lanes.
    xt = jnp.pad(x, ((0, b_pad - B), (0, 0))).T.astype(cdt)      # (24, b_pad)
    w1t = w1.T.astype(cdt)                                       # (15, 24)
    w2t = w2.T.astype(cdt)                                       # (6, 15)
    b1c = b1.reshape(hid_dim, 1).astype(jnp.float32)             # (15, 1)
    b2c = b2.reshape(out_dim, 1).astype(jnp.float32)             # (6, 1)

    const = lambda i: (0, 0)   # params: VMEM-resident across all grid steps

    bytes_accessed = (
        xt.size * xt.dtype.itemsize            # read x tiles
        + b_pad * out_dim * 4                  # write output tiles
        + w1t.size * w1t.dtype.itemsize
        + w2t.size * w2t.dtype.itemsize
        + (hid_dim + out_dim) * 4
    )

    yt = pl.pallas_call(
        mlp_kernel,
        out_shape=jax.ShapeDtypeStruct((out_dim, b_pad), jnp.float32),
        grid=(b_pad // tile_b,),
        in_specs=[
            pl.BlockSpec((in_dim, tile_b), lambda i: (0, i)),    # x tiles
            pl.BlockSpec((hid_dim, in_dim), const),              # w1^T
            pl.BlockSpec((hid_dim, 1), const),                   # b1
            pl.BlockSpec((out_dim, hid_dim), const),             # w2^T
            pl.BlockSpec((out_dim, 1), const),                   # b2
        ],
        out_specs=pl.BlockSpec((out_dim, tile_b), lambda i: (0, i)),
        compiler_params=pltpu.CompilerParams(
            dimension_semantics=("parallel",)),
        cost_estimate=pl.CostEstimate(
            flops=2 * b_pad * (in_dim * hid_dim + hid_dim * out_dim),
            transcendentals=0,
            bytes_accessed=bytes_accessed),
    )(xt, w1t, b1c, w2t, b2c)

    # Back to the PyTorch-facing (B, out) layout; drop batch padding.
    return yt.T[:B]


def init_params(key):
    """Deterministic init mimicking nn.Linear's U(-1/sqrt(fan_in), 1/sqrt(fan_in))."""
    k1, k2, k3, k4 = jax.random.split(key, 4)
    bound1 = 1.0 / jnp.sqrt(24.0)
    bound2 = 1.0 / jnp.sqrt(15.0)
    # Stored as (in, out) so y = x @ W + b matches nn.Linear's x @ W.T + b.
    w1 = jax.random.uniform(k1, (24, 15), jnp.float32, -bound1, bound1)
    b1 = jax.random.uniform(k2, (15,), jnp.float32, -bound1, bound1)
    w2 = jax.random.uniform(k3, (15, 6), jnp.float32, -bound2, bound2)
    b2 = jax.random.uniform(k4, (6,), jnp.float32, -bound2, bound2)
    return w1, b1, w2, b2


if __name__ == "__main__":
    key = jax.random.PRNGKey(0)
    kx, kp = jax.random.split(key)

    batch = 8
    x = jax.random.normal(kx, (batch, 24), jnp.float32)
    w1, b1, w2, b2 = init_params(kp)

    out = mlp_forward(x, w1, b1, w2, b2)
    out = jax.block_until_ready(out)

    # Reference check in plain JAX (same math as the PyTorch forward).
    ref = jnp.maximum(x @ w1 + b1, 0.0) @ w2 + b2
    assert out.shape == (batch, 6)
    assert jnp.allclose(out, ref, atol=1e-5, rtol=1e-5)

    print("KERNEL_OK")
</pallas_src>

<mosaic_0001>
module attributes {stable_mosaic.version = 11 : i64} {
  func.func @mlp_kernel(%arg0: i32, %arg1: memref<24x128xf32, #tpu.memory_space<vmem>>, %arg2: memref<15x24xf32, #tpu.memory_space<vmem>>, %arg3: memref<15x1xf32, #tpu.memory_space<vmem>>, %arg4: memref<6x15xf32, #tpu.memory_space<vmem>>, %arg5: memref<6x1xf32, #tpu.memory_space<vmem>>, %arg6: memref<6x128xf32, #tpu.memory_space<vmem>>) attributes {dimension_semantics = [#tpu.dimension_semantics<parallel>], iteration_bounds = array<i64: 1>, scalar_prefetch = 0 : i64, scratch_operands = 0 : i64, tpu.core_type = #tpu.core_type<tc>, window_params = [{transform_indices = @transform_0, window_bounds = array<i64: 24, 128>}, {pipeline_mode = #tpu.pipeline_mode<synchronous>, transform_indices = @transform_1, window_bounds = array<i64: 15, 24>}, {pipeline_mode = #tpu.pipeline_mode<synchronous>, transform_indices = @transform_2, window_bounds = array<i64: 15, 1>}, {pipeline_mode = #tpu.pipeline_mode<synchronous>, transform_indices = @transform_3, window_bounds = array<i64: 6, 15>}, {pipeline_mode = #tpu.pipeline_mode<synchronous>, transform_indices = @transform_4, window_bounds = array<i64: 6, 1>}, {transform_indices = @transform_5, window_bounds = array<i64: 6, 128>}]} {
    %c0 = arith.constant 0 : index
    %c0_0 = arith.constant 0 : index
    %0 = vector.load %arg2[%c0, %c0_0] : memref<15x24xf32, #tpu.memory_space<vmem>>, vector<15x24xf32>
    %c0_1 = arith.constant 0 : index
    %c0_2 = arith.constant 0 : index
    %1 = vector.load %arg1[%c0_1, %c0_2] : memref<24x128xf32, #tpu.memory_space<vmem>>, vector<24x128xf32>
    %cst = arith.constant dense<0.000000e+00> : vector<15x128xf32>
    %2 = tpu.matmul %0, %1, %cst {dimension_numbers = #tpu.dot_dimension_numbers<[1], [0], [0], [1], [0, 0, 1, 1], [], []>} : vector<15x24xf32>, vector<24x128xf32>, vector<15x128xf32> -> vector<15x128xf32>
    %c0_3 = arith.constant 0 : index
    %c0_4 = arith.constant 0 : index
    %3 = vector.load %arg3[%c0_3, %c0_4] : memref<15x1xf32, #tpu.memory_space<vmem>>, vector<15x1xf32>
    %4 = vector.broadcast %3 : vector<15x1xf32> to vector<15x128xf32>
    %5 = arith.addf %2, %4 : vector<15x128xf32>
    %cst_5 = arith.constant 0.000000e+00 : f32
    %6 = vector.broadcast %cst_5 : f32 to vector<15x128xf32>
    %7 = arith.maximumf %5, %6 : vector<15x128xf32>
    %c0_6 = arith.constant 0 : index
    %c0_7 = arith.constant 0 : index
    %8 = vector.load %arg4[%c0_6, %c0_7] : memref<6x15xf32, #tpu.memory_space<vmem>>, vector<6x15xf32>
    %cst_8 = arith.constant dense<0.000000e+00> : vector<6x128xf32>
    %9 = tpu.matmul %8, %7, %cst_8 {dimension_numbers = #tpu.dot_dimension_numbers<[1], [0], [0], [1], [0, 0, 1, 1], [], []>} : vector<6x15xf32>, vector<15x128xf32>, vector<6x128xf32> -> vector<6x128xf32>
    %c0_9 = arith.constant 0 : index
    %c0_10 = arith.constant 0 : index
    %10 = vector.load %arg5[%c0_9, %c0_10] : memref<6x1xf32, #tpu.memory_space<vmem>>, vector<6x1xf32>
    %11 = vector.broadcast %10 : vector<6x1xf32> to vector<6x128xf32>
    %12 = arith.addf %9, %11 : vector<6x128xf32>
    %c0_11 = arith.constant 0 : index
    %c0_12 = arith.constant 0 : index
    %13 = vector.load %arg6[%c0_11, %c0_12] : memref<6x128xf32, #tpu.memory_space<vmem>>, vector<6x128xf32>
    tpu.vector_store %arg6[%c0_11, %c0_12], %12 {strides = array<i32>} : memref<6x128xf32, #tpu.memory_space<vmem>>, vector<6x128xf32>,
    return
  }
  func.func @transform_0(%arg0: i32) -> (i32, i32) {
    %c0_i32 = arith.constant 0 : i32
    %c0_i32_0 = arith.constant 0 : i32
    return %c0_i32, %arg0 : i32, i32
  }
  func.func @transform_1(%arg0: i32) -> (i32, i32) {
    %c0_i32 = arith.constant 0 : i32
    %c0_i32_0 = arith.constant 0 : i32
    %c0_i32_1 = arith.constant 0 : i32
    return %c0_i32, %c0_i32_0 : i32, i32
  }
  func.func @transform_2(%arg0: i32) -> (i32, i32) {
    %c0_i32 = arith.constant 0 : i32
    %c0_i32_0 = arith.constant 0 : i32
    %c0_i32_1 = arith.constant 0 : i32
    return %c0_i32, %c0_i32_0 : i32, i32
  }
  func.func @transform_3(%arg0: i32) -> (i32, i32) {
    %c0_i32 = arith.constant 0 : i32
    %c0_i32_0 = arith.constant 0 : i32
    %c0_i32_1 = arith.constant 0 : i32
    return %c0_i32, %c0_i32_0 : i32, i32
  }
  func.func @transform_4(%arg0: i32) -> (i32, i32) {
    %c0_i32 = arith.constant 0 : i32
    %c0_i32_0 = arith.constant 0 : i32
    %c0_i32_1 = arith.constant 0 : i32
    return %c0_i32, %c0_i32_0 : i32, i32
  }
  func.func @transform_5(%arg0: i32) -> (i32, i32) {
    %c0_i32 = arith.constant 0 : i32
    %c0_i32_0 = arith.constant 0 : i32
    return %c0_i32, %arg0 : i32, i32
  }
}

</mosaic_0001>

<llo_original>
// kernel: tpu_custom_call.1
$region0: #{tpu_custom_call.1}
  #allocation0 [shape = 'u32[]', space=smem, size = 0x4, offset = 0x4, fixed_abs, tag = 'smem constant byte address 0x4 - core index']
  #allocation1 [shape = 'u32[144,128]{1,0:T(1,128)}', space=vmem, size = 0x12000, scoped, tag = 'internal scratch']
  %s0 = inlined_call_operand.vmem [shape: f32[24,128], index: 0, kind: input, shape index: {}]
  %s1 = inlined_call_operand.hbm [shape: f32[15,24], index: 1, kind: input, shape index: {}]
  %s2 = inlined_call_operand.vmem [shape: f32[15,1], index: 2, kind: input, shape index: {}]
  %s3 = inlined_call_operand.vmem [shape: f32[6,15], index: 3, kind: input, shape index: {}]
  %s4 = inlined_call_operand.vmem [shape: f32[6,1], index: 4, kind: input, shape index: {}]
  %s5 = inlined_call_operand.hbm [shape: f32[6,128], index: 5, kind: output, shape index: {}]
  %s6 = sld [smem:[#allocation0]]
  $region34: #{tpu_custom_call.1} parent=0
    _
  %s8 = ssub.s32 1, %s6
  %s9 = scalar_select 0, %s8, %s6
  $region1: #{tpu_custom_call.1} parent=0
    #allocation2 [shape = 'u8[8192]{0}', space=vmem, size = 0x2000, scoped, tag = 'input window, operand 1, single buffered']
    #allocation3 [shape = 's32[1]{0}', space=sflag, size = 0x4, scoped, tag = 'scoped memory for tpu_custom_call.1']
    #allocation4 [shape = 's32[1]{0}', space=sflag, size = 0x4, scoped, tag = 'scoped memory for tpu_custom_call.1']
    #allocation5 [shape = 'u8[4096]{0}', space=vmem, size = 0x1000, scoped, tag = 'output window, operand 0, single buffered']
    %10 = vsyncpa [#allocation3], 0
    %11 = vsyncpa [#allocation4], 0
    // Predicated region
    $region2: #{tpu_custom_call.1} parent=1 // pred_check
      _
    $region3: #{tpu_custom_call.1} parent=1 // pred_check_branch
      %13 = sbr.rel (0) target = $region5
    $region4: #{tpu_custom_call.1} parent=1 // pred_region
      _
    $region5: #{tpu_custom_call.1} parent=1 // pred_fallthru
      _
    // Predicated region
    $region6: #{tpu_custom_call.1} parent=1 // pred_check
      _
    $region7: #{tpu_custom_call.1} parent=1 // pred_check_branch
      %15 = sbr.rel (0) target = $region9
    $region8: #{tpu_custom_call.1} parent=1 // pred_region
      %s17 = ssub.s32 256, 256
      %18 = vsyncadd [#allocation3], %s17
      %s19 = sshll.u32 [#allocation2], 4
      %s20 = int_to_ptr.vmem [resolvable:$true] %s19
      %25 = dma.hbm_to_vmem [thread:$0]  %s1, 256, %s20, [#allocation3], 128, 128, 8
    $region9: #{tpu_custom_call.1} parent=1 // pred_fallthru
      _
    // Predicated region
    $region10: #{tpu_custom_call.1} parent=1 // pred_check
      _
    $region11: #{tpu_custom_call.1} parent=1 // pred_check_branch
      %27 = sbr.rel (0) target = $region13
    $region12: #{tpu_custom_call.1} parent=1 // pred_region
      _
    $region13: #{tpu_custom_call.1} parent=1 // pred_fallthru
      _
    // Predicated region
    $region14: #{tpu_custom_call.1} parent=1 // pred_check
      _
    $region15: #{tpu_custom_call.1} parent=1 // pred_check_branch
      %29 = sbr.rel (0) target = $region17
    $region16: #{tpu_custom_call.1} parent=1 // pred_region
      _
    $region17: #{tpu_custom_call.1} parent=1 // pred_fallthru
      _
    // Predicated region
    $region18: #{tpu_custom_call.1} parent=1 // pred_check
      _
    $region19: #{tpu_custom_call.1} parent=1 // pred_check_branch
      %31 = sbr.rel (0) target = $region21
    $region20: #{tpu_custom_call.1} parent=1 // pred_region
      _
    $region21: #{tpu_custom_call.1} parent=1 // pred_fallthru
      _
    // Predicated region
    $region22: #{tpu_custom_call.1} parent=1 // pred_check
      _
    $region23: #{tpu_custom_call.1} parent=1 // pred_check_branch
      %33 = sbr.rel (0) target = $region25
    $region24: #{tpu_custom_call.1} parent=1 // pred_region
      %34 = dma.done [#allocation3], 256
    $region25: #{tpu_custom_call.1} parent=1 // pred_fallthru
      _
    %v35 = vld [vmem:[#allocation2] sm:$0xff]
    %v36 = vld [vmem:[#allocation2 + $0x8] sm:$0x7f]
    %v37 = vld [vmem:[%s0] sm:$0xff]
    %v38 = vld [vmem:[%s0 + $0x8] sm:$0xff]
    %v39 = vld [vmem:[%s0 + $0x10] sm:$0xff]
    %v40 = vld [vmem:[%s2] sm:$0xff]
    %v41 = vld [vmem:[%s2 + $0x8] sm:$0x7f]
    %43 = vset.pattern.permute.xlu0 0
    %44 = vperm.xlu0 %43, %v40
    %v45 = vpop.permute.xlu0 %44
    %48 = vset.pattern.permute.xlu0 0
    %49 = vperm.xlu0 %48, %v41
    %v50 = vpop.permute.xlu0 %49
    %vm52 = vcmask 195584
    %v54 = vsel %vm52, %v35, 0
    %v57 = vsel %vm52, %v36, 0
    %59 = vmatprep.subr.mxu0 0.0
    %60 = vmatpush1.msra.mxu0 %v37
    %61 = vmatprep.subr.mxu0 0.0
    %62 = vmatpush1.msra.mxu0 %v38
    %63 = vmatprep.subr.mxu0 0.0
    %64 = vmatpush1.msra.mxu0 %v39
    %65 = vmatprep.subr.mxu0 0.0
    %66 = vmatpush1.msra.mxu0 0.0
    %67 = vmatprep.subr.mxu0 0.0
    %68 = vmatpush1.msra.mxu0 0.0
    %69 = vmatprep.subr.mxu0 0.0
    %70 = vmatpush1.msra.mxu0 0.0
    %71 = vmatprep.subr.mxu0 0.0
    %72 = vmatpush1.msra.mxu0 0.0
    %73 = vmatprep.subr.mxu0 0.0
    %74 = vmatpush1.msra.mxu0 0.0
    %75 = vmatprep.subr.mxu0 0.0
    %76 = vmatpush1.msra.mxu0 0.0
    %77 = vmatprep.subr.mxu0 0.0
    %78 = vmatpush1.msra.mxu0 0.0
    %79 = vmatprep.subr.mxu0 0.0
    %80 = vmatpush1.msra.mxu0 0.0
    %81 = vmatprep.subr.mxu0 0.0
    %82 = vmatpush1.msra.mxu0 0.0
    %83 = vmatprep.subr.mxu0 0.0
    %84 = vmatpush1.msra.mxu0 0.0
    %85 = vmatprep.subr.mxu0 0.0
    %86 = vmatpush1.msra.mxu0 0.0
    %87 = vmatprep.subr.mxu0 0.0
    %88 = vmatpush1.msra.mxu0 0.0
    %89 = vmatprep.subr.mxu0 0.0
    %90 = vmatpush1.msra.mxu0 0.0
    %91 = vmatprep.subr.mxu0 0.0
    %92 = vmatpush1.msra.mxu0 0.0
    %93 = vmatprep.subr.mxu0 0.0
    %94 = vmatpush1.msra.mxu0 0.0
    %95 = vmatprep.subr.mxu0 0.0
    %96 = vmatpush1.msra.mxu0 0.0
    %97 = vmatprep.subr.mxu0 0.0
    %98 = vmatpush1.msra.mxu0 0.0
    %99 = vmatprep.subr.mxu0 0.0
    %100 = vmatpush1.msra.mxu0 0.0
    %101 = vmatprep.subr.mxu0 0.0
    %102 = vmatpush1.msra.mxu0 0.0
    %103 = vmatprep.subr.mxu0 0.0
    %104 = vmatpush1.msra.mxu0 0.0
    %105 = vmatprep.subr.mxu0 0.0
    %106 = vmatpush1.msra.mxu0 0.0
    %107 = vmatprep.subr.mxu0 0.0
    %108 = vmatpush1.msra.mxu0 0.0
    %109 = vmatprep.subr.mxu0 0.0
    %110 = vmatpush1.msra.mxu0 0.0
    %111 = vmatprep.subr.mxu0 0.0
    %112 = vmatpush1.msra.mxu0 0.0
    %113 = vmatprep.subr.mxu0 0.0
    %114 = vmatpush1.msra.mxu0 0.0
    %115 = vmatprep.subr.mxu0 0.0
    %116 = vmatpush1.msra.mxu0 0.0
    %117 = vmatprep.subr.mxu0 0.0
    %118 = vmatpush1.msra.mxu0 0.0
    %119 = vmatprep.subr.mxu0 0.0
    %120 = vmatpush1.msra.mxu0 0.0
    %121 = vmatprep.subr.mxu0 0.0
    %122 = vmatpush1.msra.mxu0 0.0
    %123 = vmatprep.mubr.f32.mxu0 0.0
    %124 = vmatmul.mubr.f32.gmra.mrb[0].mxu0 %v54
    %v125 = vpop.f32.mrb[0].mxu0
    %v126 = vadd.f32 %v45, %v125
    %v127 = vpop.f32.mrb[0].mxu0
    %128 = vmatprep.mubr.f32.mxu0 0.0
    %129 = vmatmul.mubr.f32.gmra.mrb[0].mxu0 %v57
    %v130 = vpop.f32.mrb[0].mxu0
    %v131 = vadd.f32 %v50, %v130
    %v132 = vpop.f32.mrb[0].mxu0
    %133 = vdwg.mxu0
    %v134 = vmax.f32 %v126, 0.0
    %v135 = vmax.f32 %v131, 0.0
    %v136 = vld [vmem:[%s3] sm:$0x3f]
    %v137 = vld [vmem:[%s4] sm:$0x3f]
    %139 = vset.pattern.permute.xlu0 0
    %140 = vperm.xlu0 %139, %v137
    %v141 = vpop.permute.xlu0 %140
    %vm143 = vcmask 121856
    %v145 = vsel %vm143, %v136, 0
    %vm147 = vcmask 1046528
    %v149 = vsel %vm147, %v135, 0
    %151 = vmatprep.subr.mxu0 0.0
    %152 = vmatpush1.msra.mxu0 %v134
    %153 = vmatprep.subr.mxu0 0.0
    %154 = vmatpush1.msra.mxu0 %v149
    %155 = vmatprep.subr.mxu0 0.0
    %156 = vmatpush1.msra.mxu0 0.0
    %157 = vmatprep.subr.mxu0 0.0
    %158 = vmatpush1.msra.mxu0 0.0
    %159 = vmatprep.subr.mxu0 0.0
    %160 = vmatpush1.msra.mxu0 0.0
    %161 = vmatprep.subr.mxu0 0.0
    %162 = vmatpush1.msra.mxu0 0.0
    %163 = vmatprep.subr.mxu0 0.0
    %164 = vmatpush1.msra.mxu0 0.0
    %165 = vmatprep.subr.mxu0 0.0
    %166 = vmatpush1.msra.mxu0 0.0
    %167 = vmatprep.subr.mxu0 0.0
    %168 = vmatpush1.msra.mxu0 0.0
    %169 = vmatprep.subr.mxu0 0.0
    %170 = vmatpush1.msra.mxu0 0.0
    %171 = vmatprep.subr.mxu0 0.0
    %172 = vmatpush1.msra.mxu0 0.0
    %173 = vmatprep.subr.mxu0 0.0
    %174 = vmatpush1.msra.mxu0 0.0
    %175 = vmatprep.subr.mxu0 0.0
    %176 = vmatpush1.msra.mxu0 0.0
    %177 = vmatprep.subr.mxu0 0.0
    %178 = vmatpush1.msra.mxu0 0.0
    %179 = vmatprep.subr.mxu0 0.0
    %180 = vmatpush1.msra.mxu0 0.0
    %181 = vmatprep.subr.mxu0 0.0
    %182 = vmatpush1.msra.mxu0 0.0
    %183 = vmatprep.subr.mxu0 0.0
    %184 = vmatpush1.msra.mxu0 0.0
    %185 = vmatprep.subr.mxu0 0.0
    %186 = vmatpush1.msra.mxu0 0.0
    %187 = vmatprep.subr.mxu0 0.0
    %188 = vmatpush1.msra.mxu0 0.0
    %189 = vmatprep.subr.mxu0 0.0
    %190 = vmatpush1.msra.mxu0 0.0
    %191 = vmatprep.subr.mxu0 0.0
    %192 = vmatpush1.msra.mxu0 0.0
    %193 = vmatprep.subr.mxu0 0.0
    %194 = vmatpush1.msra.mxu0 0.0
    %195 = vmatprep.subr.mxu0 0.0
    %196 = vmatpush1.msra.mxu0 0.0
    %197 = vmatprep.subr.mxu0 0.0
    %198 = vmatpush1.msra.mxu0 0.0
    %199 = vmatprep.subr.mxu0 0.0
    %200 = vmatpush1.msra.mxu0 0.0
    %201 = vmatprep.subr.mxu0 0.0
    %202 = vmatpush1.msra.mxu0 0.0
    %203 = vmatprep.subr.mxu0 0.0
    %204 = vmatpush1.msra.mxu0 0.0
    %205 = vmatprep.subr.mxu0 0.0
    %206 = vmatpush1.msra.mxu0 0.0
    %207 = vmatprep.subr.mxu0 0.0
    %208 = vmatpush1.msra.mxu0 0.0
    %209 = vmatprep.subr.mxu0 0.0
    %210 = vmatpush1.msra.mxu0 0.0
    %211 = vmatprep.subr.mxu0 0.0
    %212 = vmatpush1.msra.mxu0 0.0
    %213 = vmatprep.subr.mxu0 0.0
    %214 = vmatpush1.msra.mxu0 0.0
    %215 = vmatprep.mubr.f32.mxu0 0.0
    %216 = vmatmul.mubr.f32.gmra.mrb[0].mxu0 %v145
    %v217 = vpop.f32.mrb[0].mxu0
    %v218 = vadd.f32 %v141, %v217
    %v219 = vpop.f32.mrb[0].mxu0
    %220 = vdwg.mxu0
    %221 = vst [vmem:[#allocation5] sm:$0x3f] %v218
    // Predicated region
    $region26: #{tpu_custom_call.1} parent=1 // pred_check
      _
    $region27: #{tpu_custom_call.1} parent=1 // pred_check_branch
      %223 = sbr.rel (0) target = $region29
    $region28: #{tpu_custom_call.1} parent=1 // pred_region
      %s225 = ssub.s32 128, 128
      %226 = vsyncadd [#allocation4], %s225
      %s228 = sshll.u32 [#allocation5], 4
      %s229 = int_to_ptr.vmem [resolvable:$true] %s228
      %231 = dma.vmem_to_hbm [thread:$0]  %s229, 128, %s5, [#allocation4]
    $region29: #{tpu_custom_call.1} parent=1 // pred_fallthru
      _
    // Predicated region
    $region30: #{tpu_custom_call.1} parent=1 // pred_check
      _
    $region31: #{tpu_custom_call.1} parent=1 // pred_check_branch
      %233 = sbr.rel (0) target = $region33
    $region32: #{tpu_custom_call.1} parent=1 // pred_region
      %234 = dma.done [#allocation4], 128
    $region33: #{tpu_custom_call.1} parent=1 // pred_fallthru
      _
    %235 = vsyncpa [#allocation3], 1
    %236 = vsyncpa [#allocation4], 1

</llo_original>
